<compile_context>
chip_gen: v7x
topology: tpu7x:2x2x1
jax: 0.10.0
libtpu: 0.0.40
codegen_flags: <defaults>
</compile_context>

<pallas_src>
import functools
import math

import numpy as np

import jax
import jax.numpy as jnp
from jax.experimental import pallas as pl
from jax.experimental.pallas import tpu as pltpu


def _offset_dist_proj_kernel(x_ref, w_ref, o_ref, *scratch, k, fold):
    # x_ref : (TR, LANES)       LANES = PACK*C, PACK logical rows per sublane row
    # w_ref : (LANES, 2K)       constant grouped-reduction weights [W_num | W_den]
    # o_ref : (TR//fold, fold*K) lane-dense output slab (same flat bytes as (TR, K))
    x = x_ref[...].astype(jnp.float32)

    # Stable softmax shift: per packed-sublane-row max (>= every group max;
    # softmax is shift-invariant).  Underflow of a whole group is handled by
    # the den clamp below (no inf/NaN), matching the reference up to fp noise.
    row_max = jnp.max(x, axis=-1, keepdims=True)
    e = jnp.exp(x - row_max)                                  # (TR, LANES)
    # TODO(synk): if v7x profiling shows the single EUP slot binds (HBM no longer
    # hides exp at ~3.2 TB/s), compute exp in bf16 (v6e/v7x only) keeping the dot f32.

    # ONE fused grouped-sum matmul on the otherwise-idle MXU:
    #   nd[:, :K] = sum_b e * project[b]   (numerator per group)
    #   nd[:, K:] = sum_b e                (denominator per group)
    nd = jnp.dot(e, w_ref[...], preferred_element_type=jnp.float32)   # (TR, 2K)
    num = nd[:, :k]
    den = jnp.maximum(nd[:, k:], 1e-30)                       # guard approx-recip inf/NaN

    inv = pl.reciprocal(den, approx=True)                     # EUP fast path
    inv = inv * (2.0 - den * inv)                              # one Newton step
    res = num * inv                                            # (TR, K) f32

    if fold == 1:
        o_ref[...] = res.astype(o_ref.dtype)
    else:
        # Sublane->lane fold: (TR, K) -> (TR//fold, fold*K == 128 lanes).
        # Staged through a small VMEM scratch, then gathered with sublane-
        # strided reads (rows j, j+fold, ...) into static lane slices of the
        # dense output block.  All VMEM-local; rides idle vld/vst slots.
        stage = scratch[0]
        stage[...] = res
        n_out = o_ref.shape[0]                                 # TR // fold
        for j in range(fold):                                  # static unroll (tiny)
            part = stage[pl.ds(j, n_out, stride=fold), :]      # (TR//fold, K)
            o_ref[:, j * k:(j + 1) * k] = part.astype(o_ref.dtype)


def _round_up(a, b):
    return (a + b - 1) // b * b


@functools.partial(
    jax.jit,
    static_argnames=("num_offsets", "reg_start", "reg_end", "reg_max", "tile_rows"),
)
def offset_dist_proj(x, *, num_offsets, reg_start, reg_end, reg_max, tile_rows=2048):
    """x: (..., num_offsets * (reg_max + 1)) -> (..., num_offsets)."""
    bins = reg_max + 1
    c = num_offsets * bins
    lead = x.shape[:-1]
    assert x.shape[-1] == c, (x.shape, num_offsets, bins)
    m = math.prod(lead) if lead else 1

    # ---- static layout planning (all Python/numpy at trace time) ----------
    # Row packing so the input slab is a multiple of 128 lanes wide.
    pack = math.lcm(c, 128) // c            # power of two (128 / gcd(c, 128))
    if pack * c > 1024:                      # avoid absurd lane widths for odd C
        pack = 1
    while pack > 1 and m % pack:             # ragged M: degrade instead of jnp.pad
        pack //= 2
    lanes = pack * c
    k = pack * num_offsets
    rows = m // pack

    # Output fold so the stored slab is 128-lane dense when possible.
    fold = 1
    if k < 128 and 128 % k == 0:
        fold = min(128 // k, 16)
        while fold > 1 and rows % fold:      # ragged rows: shrink fold, never pad
            fold //= 2
    out_w = fold * k
    out_rows = rows // fold

    # Row-tile: dtype-aware sublane alignment; >=2 grid steps when big enough
    # so the "parallel" grid axis shards across v7x's two TensorCores.
    itemsize = jnp.dtype(x.dtype).itemsize
    sub = {4: 8, 2: 16, 1: 32}.get(itemsize, 8)
    align = math.lcm(8 * fold, sub)
    tr = min(tile_rows, _round_up(rows, align))
    tr = max(align, _round_up(tr, align))
    if pl.cdiv(rows, tr) == 1 and rows >= 2 * align:
        tr = max(align, _round_up(pl.cdiv(rows, 2), align))
    grid = (pl.cdiv(rows, tr),)

    # Constant grouped-reduction weights, built once at trace time with numpy.
    # lane L -> packed row r = L // c, offset group g, bin b.
    project = np.linspace(float(reg_start), float(reg_end), bins).astype(np.float32)
    lane = np.arange(lanes)
    grp = (lane % c) // bins
    bidx = lane % bins
    col = (lane // c) * num_offsets + grp
    w_np = np.zeros((lanes, 2 * k), dtype=np.float32)
    w_np[lane, col] = project[bidx]          # numerator weights
    w_np[lane, k + col] = 1.0                # denominator weights
    w = jnp.asarray(w_np)

    x_lane = x.reshape(rows, lanes)          # free: row-major view of the same bytes

    kernel = functools.partial(_offset_dist_proj_kernel, k=k, fold=fold)
    scratch_shapes = [pltpu.VMEM((tr, k), jnp.float32)] if fold > 1 else []

    out = pl.pallas_call(
        kernel,
        out_shape=jax.ShapeDtypeStruct((out_rows, out_w), x.dtype),
        grid_spec=pltpu.PrefetchScalarGridSpec(
            num_scalar_prefetch=0,
            grid=grid,
            in_specs=[
                pl.BlockSpec((tr, lanes), lambda i: (i, 0)),
                pl.BlockSpec((lanes, 2 * k), lambda i: (0, 0)),   # constant block
            ],
            out_specs=pl.BlockSpec((tr // fold, out_w), lambda i: (i, 0)),
            scratch_shapes=scratch_shapes,
        ),
        compiler_params=pltpu.CompilerParams(
            dimension_semantics=("parallel",),
            # 32 MiB is the safe cap on every generation (half of v7x's 64 MiB
            # physical VMEM); per-step footprint here is only a few MiB.
            vmem_limit_bytes=32 * 1024 * 1024,
        ),
    )(x_lane, w)

    out = out.reshape(m, num_offsets)        # free reshape back (same flat bytes)
    return out.reshape(*lead, num_offsets)


def offset_dist_proj_ref(x, *, num_offsets, reg_start, reg_end, reg_max):
    """Pure-JAX reference matching the PyTorch forward exactly."""
    bins = reg_max + 1
    project = jnp.linspace(reg_start, reg_end, bins, dtype=jnp.float32)
    shape = x.shape
    xr = x.reshape(*shape[:-1], num_offsets, bins)
    p = jax.nn.softmax(xr.astype(jnp.float32), axis=-1)
    y = jnp.einsum("...b,b->...", p, project)
    return y.astype(x.dtype)


if __name__ == "__main__":
    # Module hyper-parameters (deterministic, in-script).
    num_offsets = 4
    reg_start = 0.0
    reg_end = 7.0
    reg_max = 7
    bins = reg_max + 1

    # Small example input: (batch=2, num_points=16, num_offsets*(reg_max+1)=32)
    key = jax.random.PRNGKey(0)
    x = jax.random.normal(key, (2, 16, num_offsets * bins), dtype=jnp.float32)

    y = offset_dist_proj(
        x, num_offsets=num_offsets, reg_start=reg_start, reg_end=reg_end, reg_max=reg_max
    )
    y = jax.block_until_ready(y)

    y_ref = offset_dist_proj_ref(
        x, num_offsets=num_offsets, reg_start=reg_start, reg_end=reg_end, reg_max=reg_max
    )
    assert y.shape == (2, 16, num_offsets), y.shape
    assert jnp.allclose(y, y_ref, atol=1e-5, rtol=1e-4), float(jnp.max(jnp.abs(y - y_ref)))

    print("KERNEL_OK")
</pallas_src>

<mosaic_0001>
module attributes {stable_mosaic.version = 11 : i64} {
  func.func @_offset_dist_proj_kernel(%arg0: i32, %arg1: memref<64x128xf32, #tpu.memory_space<vmem>>, %arg2: memref<128x32xf32, #tpu.memory_space<vmem>>, %arg3: memref<8x128xf32, #tpu.memory_space<vmem>>, %arg4: memref<64x16xf32, #tpu.memory_space<vmem>>) attributes {dimension_semantics = [#tpu.dimension_semantics<parallel>], iteration_bounds = array<i64: 1>, scalar_prefetch = 0 : i64, scratch_operands = 1 : i64, tpu.core_type = #tpu.core_type<tc>, window_params = [{transform_indices = @transform_0, window_bounds = array<i64: 64, 128>}, {pipeline_mode = #tpu.pipeline_mode<synchronous>, transform_indices = @transform_1, window_bounds = array<i64: 128, 32>}, {transform_indices = @transform_2, window_bounds = array<i64: 8, 128>}]} {
    %c0 = arith.constant 0 : index
    %c0_0 = arith.constant 0 : index
    %0 = vector.load %arg1[%c0, %c0_0] : memref<64x128xf32, #tpu.memory_space<vmem>>, vector<64x128xf32>
    %cst = arith.constant dense<0xFF800000> : vector<64xf32>
    %1 = vector.multi_reduction <maximumf>, %0, %cst [1] : vector<64x128xf32> to vector<64xf32>
    %2 = vector.shape_cast %1 : vector<64xf32> to vector<64x1xf32>
    %3 = vector.broadcast %2 : vector<64x1xf32> to vector<64x128xf32>
    %4 = arith.subf %0, %3 : vector<64x128xf32>
    %5 = math.exp %4 : vector<64x128xf32>
    %c0_1 = arith.constant 0 : index
    %c0_2 = arith.constant 0 : index
    %6 = vector.load %arg2[%c0_1, %c0_2] : memref<128x32xf32, #tpu.memory_space<vmem>>, vector<128x32xf32>
    %cst_3 = arith.constant dense<0.000000e+00> : vector<64x32xf32>
    %7 = tpu.matmul %5, %6, %cst_3 {dimension_numbers = #tpu.dot_dimension_numbers<[1], [0], [0], [1], [0, 0, 1, 1], [], []>} : vector<64x128xf32>, vector<128x32xf32>, vector<64x32xf32> -> vector<64x32xf32>
    %8 = vector.extract_strided_slice %7 {offsets = [0, 0], sizes = [64, 16], strides = [1, 1]} : vector<64x32xf32> to vector<64x16xf32>
    %9 = vector.extract_strided_slice %7 {offsets = [0, 16], sizes = [64, 16], strides = [1, 1]} : vector<64x32xf32> to vector<64x16xf32>
    %cst_4 = arith.constant 1.000000e-30 : f32
    %10 = vector.broadcast %cst_4 : f32 to vector<64x16xf32>
    %11 = arith.maximumf %9, %10 : vector<64x16xf32>
    %12 = tpu.reciprocal %11 {approx = true} : vector<64x16xf32> -> vector<64x16xf32>
    %13 = arith.mulf %11, %12 : vector<64x16xf32>
    %cst_5 = arith.constant 2.000000e+00 : f32
    %14 = vector.broadcast %cst_5 : f32 to vector<64x16xf32>
    %15 = arith.subf %14, %13 : vector<64x16xf32>
    %16 = arith.mulf %12, %15 : vector<64x16xf32>
    %17 = arith.mulf %8, %16 : vector<64x16xf32>
    %c0_6 = arith.constant 0 : index
    %c0_7 = arith.constant 0 : index
    %18 = vector.load %arg4[%c0_6, %c0_7] : memref<64x16xf32, #tpu.memory_space<vmem>>, vector<64x16xf32>
    tpu.vector_store %arg4[%c0_6, %c0_7], %17 {strides = array<i32>} : memref<64x16xf32, #tpu.memory_space<vmem>>, vector<64x16xf32>,
    %c0_8 = arith.constant 0 : index
    %c0_9 = arith.constant 0 : index
    %19 = tpu.strided_load %arg4[%c0_8, %c0_9] {strides = array<i32: 8, 1>} : memref<64x16xf32, #tpu.memory_space<vmem>>, vector<8x16xf32>
    %c0_10 = arith.constant 0 : index
    %c0_11 = arith.constant 0 : index
    %20 = vector.load %arg3[%c0_10, %c0_11] : memref<8x128xf32, #tpu.memory_space<vmem>>, vector<8x16xf32>
    tpu.vector_store %arg3[%c0_10, %c0_11], %19 {strides = array<i32>} : memref<8x128xf32, #tpu.memory_space<vmem>>, vector<8x16xf32>,
    %c1 = arith.constant 1 : index
    %c0_12 = arith.constant 0 : index
    %21 = tpu.strided_load %arg4[%c1, %c0_12] {strides = array<i32: 8, 1>} : memref<64x16xf32, #tpu.memory_space<vmem>>, vector<8x16xf32>
    %c0_13 = arith.constant 0 : index
    %c16 = arith.constant 16 : index
    %22 = vector.load %arg3[%c0_13, %c16] : memref<8x128xf32, #tpu.memory_space<vmem>>, vector<8x16xf32>
    tpu.vector_store %arg3[%c0_13, %c16], %21 {strides = array<i32>} : memref<8x128xf32, #tpu.memory_space<vmem>>, vector<8x16xf32>,
    %c2 = arith.constant 2 : index
    %c0_14 = arith.constant 0 : index
    %23 = tpu.strided_load %arg4[%c2, %c0_14] {strides = array<i32: 8, 1>} : memref<64x16xf32, #tpu.memory_space<vmem>>, vector<8x16xf32>
    %c0_15 = arith.constant 0 : index
    %c32 = arith.constant 32 : index
    %24 = vector.load %arg3[%c0_15, %c32] : memref<8x128xf32, #tpu.memory_space<vmem>>, vector<8x16xf32>
    tpu.vector_store %arg3[%c0_15, %c32], %23 {strides = array<i32>} : memref<8x128xf32, #tpu.memory_space<vmem>>, vector<8x16xf32>,
    %c3 = arith.constant 3 : index
    %c0_16 = arith.constant 0 : index
    %25 = tpu.strided_load %arg4[%c3, %c0_16] {strides = array<i32: 8, 1>} : memref<64x16xf32, #tpu.memory_space<vmem>>, vector<8x16xf32>
    %c0_17 = arith.constant 0 : index
    %c48 = arith.constant 48 : index
    %26 = vector.load %arg3[%c0_17, %c48] : memref<8x128xf32, #tpu.memory_space<vmem>>, vector<8x16xf32>
    tpu.vector_store %arg3[%c0_17, %c48], %25 {strides = array<i32>} : memref<8x128xf32, #tpu.memory_space<vmem>>, vector<8x16xf32>,
    %c4 = arith.constant 4 : index
    %c0_18 = arith.constant 0 : index
    %27 = tpu.strided_load %arg4[%c4, %c0_18] {strides = array<i32: 8, 1>} : memref<64x16xf32, #tpu.memory_space<vmem>>, vector<8x16xf32>
    %c0_19 = arith.constant 0 : index
    %c64 = arith.constant 64 : index
    %28 = vector.load %arg3[%c0_19, %c64] : memref<8x128xf32, #tpu.memory_space<vmem>>, vector<8x16xf32>
    tpu.vector_store %arg3[%c0_19, %c64], %27 {strides = array<i32>} : memref<8x128xf32, #tpu.memory_space<vmem>>, vector<8x16xf32>,
    %c5 = arith.constant 5 : index
    %c0_20 = arith.constant 0 : index
    %29 = tpu.strided_load %arg4[%c5, %c0_20] {strides = array<i32: 8, 1>} : memref<64x16xf32, #tpu.memory_space<vmem>>, vector<8x16xf32>
    %c0_21 = arith.constant 0 : index
    %c80 = arith.constant 80 : index
    %30 = vector.load %arg3[%c0_21, %c80] : memref<8x128xf32, #tpu.memory_space<vmem>>, vector<8x16xf32>
    tpu.vector_store %arg3[%c0_21, %c80], %29 {strides = array<i32>} : memref<8x128xf32, #tpu.memory_space<vmem>>, vector<8x16xf32>,
    %c6 = arith.constant 6 : index
    %c0_22 = arith.constant 0 : index
    %31 = tpu.strided_load %arg4[%c6, %c0_22] {strides = array<i32: 8, 1>} : memref<64x16xf32, #tpu.memory_space<vmem>>, vector<8x16xf32>
    %c0_23 = arith.constant 0 : index
    %c96 = arith.constant 96 : index
    %32 = vector.load %arg3[%c0_23, %c96] : memref<8x128xf32, #tpu.memory_space<vmem>>, vector<8x16xf32>
    tpu.vector_store %arg3[%c0_23, %c96], %31 {strides = array<i32>} : memref<8x128xf32, #tpu.memory_space<vmem>>, vector<8x16xf32>,
    %c7 = arith.constant 7 : index
    %c0_24 = arith.constant 0 : index
    %33 = tpu.strided_load %arg4[%c7, %c0_24] {strides = array<i32: 8, 1>} : memref<64x16xf32, #tpu.memory_space<vmem>>, vector<8x16xf32>
    %c0_25 = arith.constant 0 : index
    %c112 = arith.constant 112 : index
    %34 = vector.load %arg3[%c0_25, %c112] : memref<8x128xf32, #tpu.memory_space<vmem>>, vector<8x16xf32>
    tpu.vector_store %arg3[%c0_25, %c112], %33 {strides = array<i32>} : memref<8x128xf32, #tpu.memory_space<vmem>>, vector<8x16xf32>,
    return
  }
  func.func @transform_0(%arg0: i32) -> (i32, i32) {
    %c0_i32 = arith.constant 0 : i32
    %c0_i32_0 = arith.constant 0 : i32
    return %arg0, %c0_i32 : i32, i32
  }
  func.func @transform_1(%arg0: i32) -> (i32, i32) {
    %c0_i32 = arith.constant 0 : i32
    %c0_i32_0 = arith.constant 0 : i32
    %c0_i32_1 = arith.constant 0 : i32
    return %c0_i32, %c0_i32_0 : i32, i32
  }
  func.func @transform_2(%arg0: i32) -> (i32, i32) {
    %c0_i32 = arith.constant 0 : i32
    %c0_i32_0 = arith.constant 0 : i32
    return %arg0, %c0_i32 : i32, i32
  }
}

</mosaic_0001>

<llo_original>
// kernel: offset_dist_proj.1
$region0: #{offset_dist_proj.1}
  #allocation0 [shape = 'u32[]', space=smem, size = 0x4, offset = 0x4, fixed_abs, tag = 'smem constant byte address 0x4 - core index']
  #allocation1 [shape = 'u32[144,128]{1,0:T(1,128)}', space=vmem, size = 0x12000, scoped, tag = 'internal scratch']
  #allocation2 [shape = 'f32[64,16]{1,0:T(8,128)}', space=vmem, size = 0x8000, scoped, tag = 'scratch operand']
  %s0 = inlined_call_operand.vmem [shape: f32[8,128], index: 0, kind: input, shape index: {}]
  %s1 = inlined_call_operand.hbm [shape: f32[128,32], index: 1, kind: input, shape index: {}]
  %s2 = inlined_call_operand.vmem [shape: f32[1,128], index: 2, kind: output, shape index: {}]
  %s3 = sld [smem:[#allocation0]]
  $region52: #{offset_dist_proj.1} parent=0
    _
  %s5 = ssub.s32 1, %s3
  %s6 = scalar_select 0, %s5, %s3
  $region1: #{offset_dist_proj.1} parent=0
    #allocation3 [shape = 'u8[65536]{0}', space=vmem, size = 0x10000, scoped, tag = 'input window, operand 1, single buffered']
    #allocation4 [shape = 's32[1]{0}', space=sflag, size = 0x4, scoped, tag = 'scoped memory for offset_dist_proj.1']
    #allocation5 [shape = 'u8[4096]{0}', space=vmem, size = 0x1000, scoped, tag = 'output window, operand 0, single buffered']
    %7 = vsyncpa [#allocation4], 0
    // Predicated region
    $region2: #{offset_dist_proj.1} parent=1 // pred_check
      _
    $region3: #{offset_dist_proj.1} parent=1 // pred_check_branch
      %9 = sbr.rel (0) target = $region5
    $region4: #{offset_dist_proj.1} parent=1 // pred_region
      _
    $region5: #{offset_dist_proj.1} parent=1 // pred_fallthru
      _
    // Predicated region
    $region6: #{offset_dist_proj.1} parent=1 // pred_check
      _
    $region7: #{offset_dist_proj.1} parent=1 // pred_check_branch
      %11 = sbr.rel (0) target = $region9
    $region8: #{offset_dist_proj.1} parent=1 // pred_region
      %s13 = ssub.s32 2048, 2048
      %14 = vsyncadd [#allocation4], %s13
      %s15 = sshll.u32 [#allocation3], 4
      %s16 = int_to_ptr.vmem [resolvable:$true] %s15
      %21 = dma.hbm_to_vmem [thread:$0]  %s1, 2048, %s16, [#allocation4], 128, 128, 8
    $region9: #{offset_dist_proj.1} parent=1 // pred_fallthru
      _
    // Predicated region
    $region10: #{offset_dist_proj.1} parent=1 // pred_check
      _
    $region11: #{offset_dist_proj.1} parent=1 // pred_check_branch
      %23 = sbr.rel (0) target = $region13
    $region12: #{offset_dist_proj.1} parent=1 // pred_region
      %24 = dma.done [#allocation4], 2048
    $region13: #{offset_dist_proj.1} parent=1 // pred_fallthru
      _
    %v25 = vld [vmem:[%s0] sm:$0xff]
    %v26 = vld [vmem:[%s0 + $0x8] sm:$0xff]
    %v27 = vld [vmem:[%s0 + $0x10] sm:$0xff]
    %v28 = vld [vmem:[%s0 + $0x18] sm:$0xff]
    %v29 = vld [vmem:[%s0 + $0x20] sm:$0xff]
    %v30 = vld [vmem:[%s0 + $0x28] sm:$0xff]
    %v31 = vld [vmem:[%s0 + $0x30] sm:$0xff]
    %v32 = vld [vmem:[%s0 + $0x38] sm:$0xff]
    %33 = vmax.xlane.f32.xlu0 %v25
    %v34 = vpop.xlane.xlu0 %33
    %35 = vmax.xlane.f32.xlu0 %v26
    %v36 = vpop.xlane.xlu0 %35
    %37 = vmax.xlane.f32.xlu0 %v27
    %v38 = vpop.xlane.xlu0 %37
    %39 = vmax.xlane.f32.xlu0 %v28
    %v40 = vpop.xlane.xlu0 %39
    %41 = vmax.xlane.f32.xlu0 %v29
    %v42 = vpop.xlane.xlu0 %41
    %43 = vmax.xlane.f32.xlu0 %v30
    %v44 = vpop.xlane.xlu0 %43
    %45 = vmax.xlane.f32.xlu0 %v31
    %v46 = vpop.xlane.xlu0 %45
    %47 = vmax.xlane.f32.xlu0 %v32
    %v48 = vpop.xlane.xlu0 %47
    %v49 = vsub.f32 %v25, %v34
    %v50 = vsub.f32 %v26, %v36
    %v51 = vsub.f32 %v27, %v38
    %v52 = vsub.f32 %v28, %v40
    %v53 = vsub.f32 %v29, %v42
    %v54 = vsub.f32 %v30, %v44
    %v55 = vsub.f32 %v31, %v46
    %v56 = vsub.f32 %v32, %v48
    %v57 = vmul.f32 %v49, 1.442695
    %v58 = vpow.pop %v57
    %v59 = vmul.f32 %v50, 1.442695
    %v60 = vpow.pop %v59
    %v61 = vmul.f32 %v51, 1.442695
    %v62 = vpow.pop %v61
    %v63 = vmul.f32 %v52, 1.442695
    %v64 = vpow.pop %v63
    %v65 = vmul.f32 %v53, 1.442695
    %v66 = vpow.pop %v65
    %v67 = vmul.f32 %v54, 1.442695
    %v68 = vpow.pop %v67
    %v69 = vmul.f32 %v55, 1.442695
    %v70 = vpow.pop %v69
    %v71 = vmul.f32 %v56, 1.442695
    %v72 = vpow.pop %v71
    %v73 = vld [vmem:[#allocation3] sm:$0xff]
    %v74 = vld [vmem:[#allocation3 + $0x8] sm:$0xff]
    %v75 = vld [vmem:[#allocation3 + $0x10] sm:$0xff]
    %v76 = vld [vmem:[#allocation3 + $0x18] sm:$0xff]
    %v77 = vld [vmem:[#allocation3 + $0x20] sm:$0xff]
    %v78 = vld [vmem:[#allocation3 + $0x28] sm:$0xff]
    %v79 = vld [vmem:[#allocation3 + $0x30] sm:$0xff]
    %v80 = vld [vmem:[#allocation3 + $0x38] sm:$0xff]
    %v81 = vld [vmem:[#allocation3 + $0x40] sm:$0xff]
    %v82 = vld [vmem:[#allocation3 + $0x48] sm:$0xff]
    %v83 = vld [vmem:[#allocation3 + $0x50] sm:$0xff]
    %v84 = vld [vmem:[#allocation3 + $0x58] sm:$0xff]
    %v85 = vld [vmem:[#allocation3 + $0x60] sm:$0xff]
    %v86 = vld [vmem:[#allocation3 + $0x68] sm:$0xff]
    %v87 = vld [vmem:[#allocation3 + $0x70] sm:$0xff]
    %v88 = vld [vmem:[#allocation3 + $0x78] sm:$0xff]
    %89 = vmatprep.subr.mxu0 0.0
    %90 = vmatpush1.msra.mxu0 %v73
    %91 = vmatprep.subr.mxu0 0.0
    %92 = vmatpush1.msra.mxu0 %v74
    %93 = vmatprep.subr.mxu0 0.0
    %94 = vmatpush1.msra.mxu0 %v75
    %95 = vmatprep.subr.mxu0 0.0
    %96 = vmatpush1.msra.mxu0 %v76
    %97 = vmatprep.subr.mxu0 0.0
    %98 = vmatpush1.msra.mxu0 %v77
    %99 = vmatprep.subr.mxu0 0.0
    %100 = vmatpush1.msra.mxu0 %v78
    %101 = vmatprep.subr.mxu0 0.0
    %102 = vmatpush1.msra.mxu0 %v79
    %103 = vmatprep.subr.mxu0 0.0
    %104 = vmatpush1.msra.mxu0 %v80
    %105 = vmatprep.subr.mxu0 0.0
    %106 = vmatpush1.msra.mxu0 %v81
    %107 = vmatprep.subr.mxu0 0.0
    %108 = vmatpush1.msra.mxu0 %v82
    %109 = vmatprep.subr.mxu0 0.0
    %110 = vmatpush1.msra.mxu0 %v83
    %111 = vmatprep.subr.mxu0 0.0
    %112 = vmatpush1.msra.mxu0 %v84
    %113 = vmatprep.subr.mxu0 0.0
    %114 = vmatpush1.msra.mxu0 %v85
    %115 = vmatprep.subr.mxu0 0.0
    %116 = vmatpush1.msra.mxu0 %v86
    %117 = vmatprep.subr.mxu0 0.0
    %118 = vmatpush1.msra.mxu0 %v87
    %119 = vmatprep.subr.mxu0 0.0
    %120 = vmatpush1.msra.mxu0 %v88
    %121 = vmatprep.subr.mxu0 0.0
    %122 = vmatpush1.msra.mxu0 0.0
    %123 = vmatprep.subr.mxu0 0.0
    %124 = vmatpush1.msra.mxu0 0.0
    %125 = vmatprep.subr.mxu0 0.0
    %126 = vmatpush1.msra.mxu0 0.0
    %127 = vmatprep.subr.mxu0 0.0
    %128 = vmatpush1.msra.mxu0 0.0
    %129 = vmatprep.subr.mxu0 0.0
    %130 = vmatpush1.msra.mxu0 0.0
    %131 = vmatprep.subr.mxu0 0.0
    %132 = vmatpush1.msra.mxu0 0.0
    %133 = vmatprep.subr.mxu0 0.0
    %134 = vmatpush1.msra.mxu0 0.0
    %135 = vmatprep.subr.mxu0 0.0
    %136 = vmatpush1.msra.mxu0 0.0
    %137 = vmatprep.subr.mxu0 0.0
    %138 = vmatpush1.msra.mxu0 0.0
    %139 = vmatprep.subr.mxu0 0.0
    %140 = vmatpush1.msra.mxu0 0.0
    %141 = vmatprep.subr.mxu0 0.0
    %142 = vmatpush1.msra.mxu0 0.0
    %143 = vmatprep.subr.mxu0 0.0
    %144 = vmatpush1.msra.mxu0 0.0
    %145 = vmatprep.subr.mxu0 0.0
    %146 = vmatpush1.msra.mxu0 0.0
    %147 = vmatprep.subr.mxu0 0.0
    %148 = vmatpush1.msra.mxu0 0.0
    %149 = vmatprep.subr.mxu0 0.0
    %150 = vmatpush1.msra.mxu0 0.0
    %151 = vmatprep.subr.mxu0 0.0
    %152 = vmatpush1.msra.mxu0 0.0
    %153 = vmatprep.mubr.f32.mxu0 0.0
    %154 = vmatmul.mubr.f32.gmra.mrb[0].mxu0 %v58
    %v155 = vpop.f32.mrb[0].mxu0
    %v156 = vadd.f32 0.0, %v155
    %v157 = vpop.f32.mrb[0].mxu0
    %158 = vmatprep.mubr.f32.mxu0 0.0
    %159 = vmatmul.mubr.f32.gmra.mrb[0].mxu0 %v60
    %v160 = vpop.f32.mrb[0].mxu0
    %v161 = vadd.f32 0.0, %v160
    %v162 = vpop.f32.mrb[0].mxu0
    %163 = vmatprep.mubr.f32.mxu0 0.0
    %164 = vmatmul.mubr.f32.gmra.mrb[0].mxu0 %v62
    %v165 = vpop.f32.mrb[0].mxu0
    %v166 = vadd.f32 0.0, %v165
    %v167 = vpop.f32.mrb[0].mxu0
    %168 = vmatprep.mubr.f32.mxu0 0.0
    %169 = vmatmul.mubr.f32.gmra.mrb[0].mxu0 %v64
    %v170 = vpop.f32.mrb[0].mxu0
    %v171 = vadd.f32 0.0, %v170
    %v172 = vpop.f32.mrb[0].mxu0
    %173 = vmatprep.mubr.f32.mxu0 0.0
    %174 = vmatmul.mubr.f32.gmra.mrb[0].mxu0 %v66
    %v175 = vpop.f32.mrb[0].mxu0
    %v176 = vadd.f32 0.0, %v175
    %v177 = vpop.f32.mrb[0].mxu0
    %178 = vmatprep.mubr.f32.mxu0 0.0
    %179 = vmatmul.mubr.f32.gmra.mrb[0].mxu0 %v68
    %v180 = vpop.f32.mrb[0].mxu0
    %v181 = vadd.f32 0.0, %v180
    %v182 = vpop.f32.mrb[0].mxu0
    %183 = vmatprep.mubr.f32.mxu0 0.0
    %184 = vmatmul.mubr.f32.gmra.mrb[0].mxu0 %v70
    %v185 = vpop.f32.mrb[0].mxu0
    %v186 = vadd.f32 0.0, %v185
    %v187 = vpop.f32.mrb[0].mxu0
    %188 = vmatprep.mubr.f32.mxu0 0.0
    %189 = vmatmul.mubr.f32.gmra.mrb[0].mxu0 %v72
    %v190 = vpop.f32.mrb[0].mxu0
    %v191 = vadd.f32 0.0, %v190
    %v192 = vpop.f32.mrb[0].mxu0
    %193 = vdwg.mxu0
    %v194 = vmax.f32 %v156, 1e-30
    %v195 = vmax.f32 %v161, 1e-30
    %v196 = vmax.f32 %v166, 1e-30
    %v197 = vmax.f32 %v171, 1e-30
    %v198 = vmax.f32 %v176, 1e-30
    %v199 = vmax.f32 %v181, 1e-30
    %v200 = vmax.f32 %v186, 1e-30
    %v201 = vmax.f32 %v191, 1e-30
    %v202 = vrcp.pop %v194
    %v203 = vrcp.pop %v195
    %v204 = vrcp.pop %v196
    %v205 = vrcp.pop %v197
    %v206 = vrcp.pop %v198
    %v207 = vrcp.pop %v199
    %v208 = vrcp.pop %v200
    %v209 = vrcp.pop %v201
    %v210 = vmul.f32 %v194, %v202
    %v211 = vmul.f32 %v195, %v203
    %v212 = vmul.f32 %v196, %v204
    %v213 = vmul.f32 %v197, %v205
    %v214 = vmul.f32 %v198, %v206
    %v215 = vmul.f32 %v199, %v207
    %v216 = vmul.f32 %v200, %v208
    %v217 = vmul.f32 %v201, %v209
    %v218 = vsub.f32 2.0, %v210
    %v219 = vsub.f32 2.0, %v211
    %v220 = vsub.f32 2.0, %v212
    %v221 = vsub.f32 2.0, %v213
    %v222 = vsub.f32 2.0, %v214
    %v223 = vsub.f32 2.0, %v215
    %v224 = vsub.f32 2.0, %v216
    %v225 = vsub.f32 2.0, %v217
    %v226 = vmul.f32 %v202, %v218
    %v227 = vmul.f32 %v203, %v219
    %v228 = vmul.f32 %v204, %v220
    %v229 = vmul.f32 %v205, %v221
    %v230 = vmul.f32 %v206, %v222
    %v231 = vmul.f32 %v207, %v223
    %v232 = vmul.f32 %v208, %v224
    %v233 = vmul.f32 %v209, %v225
    %242 = vrot.lane.b32.xlu0 %v226, 112
    %v243 = vpop.permute.xlu0 %242
    %244 = vrot.lane.b32.xlu0 %v227, 112
    %v245 = vpop.permute.xlu0 %244
    %246 = vrot.lane.b32.xlu0 %v228, 112
    %v247 = vpop.permute.xlu0 %246
    %248 = vrot.lane.b32.xlu0 %v229, 112
    %v249 = vpop.permute.xlu0 %248
    %250 = vrot.lane.b32.xlu0 %v230, 112
    %v251 = vpop.permute.xlu0 %250
    %252 = vrot.lane.b32.xlu0 %v231, 112
    %v253 = vpop.permute.xlu0 %252
    %254 = vrot.lane.b32.xlu0 %v232, 112
    %v255 = vpop.permute.xlu0 %254
    %256 = vrot.lane.b32.xlu0 %v233, 112
    %v257 = vpop.permute.xlu0 %256
    %v266 = vmul.f32 %v156, %v243
    %v267 = vmul.f32 %v161, %v245
    %v268 = vmul.f32 %v166, %v247
    %v269 = vmul.f32 %v171, %v249
    %v270 = vmul.f32 %v176, %v251
    %v271 = vmul.f32 %v181, %v253
    %v272 = vmul.f32 %v186, %v255
    %v273 = vmul.f32 %v191, %v257
    %vm274 = vcmask 130048
    %275 = vst.msk [vmem:[#allocation2] sm:$0xff] %vm274, %v266
    %276 = vst.msk [vmem:[#allocation2 + $0x8] sm:$0xff] %vm274, %v267
    %277 = vst.msk [vmem:[#allocation2 + $0x10] sm:$0xff] %vm274, %v268
    %278 = vst.msk [vmem:[#allocation2 + $0x18] sm:$0xff] %vm274, %v269
    %279 = vst.msk [vmem:[#allocation2 + $0x20] sm:$0xff] %vm274, %v270
    %280 = vst.msk [vmem:[#allocation2 + $0x28] sm:$0xff] %vm274, %v271
    %281 = vst.msk [vmem:[#allocation2 + $0x30] sm:$0xff] %vm274, %v272
    %282 = vst.msk [vmem:[#allocation2 + $0x38] sm:$0xff] %vm274, %v273
    %v283 = vld [vmem:[#allocation2] ss:$8 sm:$0xf]
    %v284 = vld [vmem:[#allocation2] ss:$8 sm:$0xf0]
    %v285 = vor.u32 %v283, %v284
    %286 = vst.msk [vmem:[#allocation5] sm:$0xff] %vm274, %v285
    %s287 = scalar_lea.vmem [#allocation2], 1
    %v288 = vld [vmem:[%s287] ss:$8 sm:$0xf]
    %v289 = vld [vmem:[%s287] ss:$8 sm:$0xf0]
    %v290 = vor.u32 %v288, %v289
    %292 = vrot.lane.b32.xlu0 %v290, 16
    %v293 = vpop.permute.xlu0 %292
    %vm295 = vcmask 261248
    %296 = vst.msk [vmem:[#allocation5] sm:$0xff] %vm295, %v293
    %s297 = scalar_lea.vmem [#allocation2], 2
    %v298 = vld [vmem:[%s297] ss:$8 sm:$0xf]
    %v299 = vld [vmem:[%s297] ss:$8 sm:$0xf0]
    %v300 = vor.u32 %v298, %v299
    %302 = vrot.lane.b32.xlu0 %v300, 32
    %v303 = vpop.permute.xlu0 %302
    %vm305 = vcmask 392448
    %306 = vst.msk [vmem:[#allocation5] sm:$0xff] %vm305, %v303
    %s307 = scalar_lea.vmem [#allocation2], 3
    %v308 = vld [vmem:[%s307] ss:$8 sm:$0xf]
    %v309 = vld [vmem:[%s307] ss:$8 sm:$0xf0]
    %v310 = vor.u32 %v308, %v309
    %312 = vrot.lane.b32.xlu0 %v310, 48
    %v313 = vpop.permute.xlu0 %312
    %vm315 = vcmask 523648
    %316 = vst.msk [vmem:[#allocation5] sm:$0xff] %vm315, %v313
    %s317 = scalar_lea.vmem [#allocation2], 4
    %v318 = vld [vmem:[%s317] ss:$8 sm:$0xf]
    %v319 = vld [vmem:[%s317] ss:$8 sm:$0xf0]
    %v320 = vor.u32 %v318, %v319
    %322 = vrot.lane.b32.xlu0 %v320, 64
    %v323 = vpop.permute.xlu0 %322
    %vm325 = vcmask 654848
    %326 = vst.msk [vmem:[#allocation5] sm:$0xff] %vm325, %v323
    %s327 = scalar_lea.vmem [#allocation2], 5
    %v328 = vld [vmem:[%s327] ss:$8 sm:$0xf]
    %v329 = vld [vmem:[%s327] ss:$8 sm:$0xf0]
    %v330 = vor.u32 %v328, %v329
    %332 = vrot.lane.b32.xlu0 %v330, 80
    %v333 = vpop.permute.xlu0 %332
    %vm335 = vcmask 786048
    %336 = vst.msk [vmem:[#allocation5] sm:$0xff] %vm335, %v333
    %s337 = scalar_lea.vmem [#allocation2], 6
    %v338 = vld [vmem:[%s337] ss:$8 sm:$0xf]
    %v339 = vld [vmem:[%s337] ss:$8 sm:$0xf0]
    %v340 = vor.u32 %v338, %v339
    %342 = vrot.lane.b32.xlu0 %v340, 96
    %v343 = vpop.permute.xlu0 %342
    %vm345 = vcmask 917248
    %346 = vst.msk [vmem:[#allocation5] sm:$0xff] %vm345, %v343
    %s347 = scalar_lea.vmem [#allocation2], 7
    %v348 = vld [vmem:[%s347] ss:$8 sm:$0xf]
    %v349 = vld [vmem:[%s347] ss:$8 sm:$0xf0]
    %v350 = vor.u32 %v348, %v349
    %352 = vrot.lane.b32.xlu0 %v350, 112
    %v353 = vpop.permute.xlu0 %352
    %vm355 = vcmask 1048448
    %356 = vst.msk [vmem:[#allocation5] sm:$0xff] %vm355, %v353
    // Predicated region
    $region14: #{offset_dist_proj.1} parent=1 // pred_check
      _
    $region15: #{offset_dist_proj.1} parent=1 // pred_check_branch
      %358 = sbr.rel (0) target = $region17
    $region16: #{offset_dist_proj.1} parent=1 // pred_region
      // Predicated region
      $region18: #{offset_dist_proj.1} parent=16 // pred_check
        _
      $region19: #{offset_dist_proj.1} parent=16 // pred_check_branch
        %360 = sbr.rel (0) target = $region21
      $region20: #{offset_dist_proj.1} parent=16 // pred_region
        // Predicated region
        $region22: #{offset_dist_proj.1} parent=20 // pred_check
          _
        $region23: #{offset_dist_proj.1} parent=20 // pred_check_branch
          %362 = sbr.rel target = $region25
        $region24: #{offset_dist_proj.1} parent=20 // pred_region
          // Predicated region
          $region37: #{offset_dist_proj.1} parent=24 // pred_check
            _
          $region38: #{offset_dist_proj.1} parent=24 // pred_check_branch
            %377 = sbr.rel (0) target = $region40
          $region39: #{offset_dist_proj.1} parent=24 // pred_region
            loop: start=0, step=1, limit=1
            $region41: #{offset_dist_proj.1} parent=39 // loop_pre_header
              _
            $region42: #{offset_dist_proj.1} parent=39 // loop_header
              %s380 = sphi 0, %s384
              %p381 = scmp.ge.s32.totalorder %s380, 1
              %s385 = sphi [#allocation5], [#allocation5]
              %s386 = sphi %s2, %s2
            $region43: #{offset_dist_proj.1} parent=39 // loop_header_branch
              %383 = sbr.rel (%p381) target = $region47
            $region44: #{offset_dist_proj.1} parent=39 // loop_body
              %v387 = vld [vmem:[%s385] sm:$0x1]
              %388 = vst [vmem:[%s386] sm:$0x1] %v387
            $region45: #{offset_dist_proj.1} parent=39 // loop_footer
              %s384 = sadd.s32 1, %s380
            $region46: #{offset_dist_proj.1} parent=39 // loop_footer_branch
              %379 = sbr.rel target = $region42
            $region47: #{offset_dist_proj.1} parent=39 // loop_exit
              _
          $region40: #{offset_dist_proj.1} parent=24 // pred_fallthru
            _
        $region25: #{offset_dist_proj.1} parent=20 // pred_fallthru
          _
        // Predicated region
        $region26: #{offset_dist_proj.1} parent=20 // pred_check
          _
        $region27: #{offset_dist_proj.1} parent=20 // pred_check_branch
          %364 = sbr.rel (0) target = $region29
        $region28: #{offset_dist_proj.1} parent=20 // pred_region
          loop: start=0, step=1, limit=1
          $region30: #{offset_dist_proj.1} parent=28 // loop_pre_header
            _
          $region31: #{offset_dist_proj.1} parent=28 // loop_header
            %s367 = sphi 0, %s371
            %p368 = scmp.ge.s32.totalorder %s367, 1
            %s372 = sphi [#allocation5], [#allocation5]
            %s373 = sphi %s2, %s2
          $region32: #{offset_dist_proj.1} parent=28 // loop_header_branch
            %370 = sbr.rel (%p368) target = $region36
          $region33: #{offset_dist_proj.1} parent=28 // loop_body
            %v374 = vld [vmem:[%s372] sm:$0x1]
            %375 = vst [vmem:[%s373] sm:$0x1] %v374
          $region34: #{offset_dist_proj.1} parent=28 // loop_footer
            %s371 = sadd.s32 1, %s367
          $region35: #{offset_dist_proj.1} parent=28 // loop_footer_branch
            %366 = sbr.rel target = $region31
          $region36: #{offset_dist_proj.1} parent=28 // loop_exit
            _
        $region29: #{offset_dist_proj.1} parent=20 // pred_fallthru
          _
      $region21: #{offset_dist_proj.1} parent=16 // pred_fallthru
        _
      %389 = vnop
    $region17: #{offset_dist_proj.1} parent=1 // pred_fallthru
      _
    // Predicated region
    $region48: #{offset_dist_proj.1} parent=1 // pred_check
      _
    $region49: #{offset_dist_proj.1} parent=1 // pred_check_branch
      %391 = sbr.rel (0) target = $region51
    $region50: #{offset_dist_proj.1} parent=1 // pred_region
      _
    $region51: #{offset_dist_proj.1} parent=1 // pred_fallthru
      _
    %392 = vsyncpa [#allocation4], 1

</llo_original>
